<compile_context>
chip_gen: v6e
topology: v6e:2x2x1
jax: 0.10.0
libtpu: 0.0.40
codegen_flags: <defaults>
</compile_context>

<pallas_src>
import functools

import jax
import jax.numpy as jnp
from jax.experimental import pallas as pl
from jax.experimental.pallas import tpu as pltpu


_VMEM_TILE_BUDGET = 32 * 1024 * 1024   # streamed blocks + temporaries per grid step
_VMEM_REQUEST_CAP = 48 * 1024 * 1024   # headroom inside v7x's 64 MiB/TC VMEM
_MAX_TILE_N = 4096                      # tokens per grid step (bf16 inputs)


def _round_lanes(x):
    return ((x + 127) // 128) * 128


def _per_token_bytes(d, k, in_itemsize, out_itemsize):
    """Double-buffered streamed blocks + in-kernel temporaries, per token."""
    dk = d * k
    ld, lk, ldk = _round_lanes(d), _round_lanes(k), _round_lanes(dk)
    blocks = 2 * ((ld + lk + ldk) * in_itemsize + ld * out_itemsize)      # q, attn, v, out
    temps = lk * (4 + in_itemsize) + 2 * ldk * in_itemsize + ld * 4       # a32/a, a_tiled, prod, out
    return blocks + temps


def _resident_bytes(h, d, k, in_itemsize):
    dk = d * k
    ld, lk, ldk = _round_lanes(d), _round_lanes(k), _round_lanes(dk)
    tok = h * d * lk * in_itemsize
    bias = h * 8 * lk * 4
    expand = 16 * ldk * in_itemsize
    reduce = dk * ld * in_itemsize
    return 2 * (tok + bias + expand + reduce)       # default double-buffering


def _pick_tile_n(n_tokens, d, k, in_itemsize, out_itemsize):
    per_tok = _per_token_bytes(d, k, in_itemsize, out_itemsize)
    cap = min(_MAX_TILE_N, max(256, (_VMEM_TILE_BUDGET // per_tok) // 16 * 16))
    if n_tokens <= cap:
        return n_tokens
    for t in range(cap, 15, -16):        # largest multiple of 16 that divides N
        if n_tokens % t == 0:
            return t
    return cap                           # non-dividing: Pallas masks the boundary block


def _swattention_av_kernel(q_ref, attn_ref, v_ref, tok_ref, bias_ref,
                           expand_ref, reduce_ref, o_ref, *, num_heads):
    """One (batch*head, token-tile) grid step.

    q_ref     : (1, tn, D)   compute dtype     attn_ref : (1, tn, K)   compute dtype
    v_ref     : (1, tn, D*K) compute dtype     (v_local with (D, K) flattened d-major)
    tok_ref   : (H, D, K)    compute dtype     bias_ref : (H, 1, K)    f32    (VMEM resident)
    expand_ref: (K, D*K)  0/1,  E[k, d*K+k'] = (k == k')               (VMEM resident)
    reduce_ref: (D*K, D)  0/1,  R[d*K+k, d'] = (d == d')               (VMEM resident)
    o_ref     : (1, tn, D)
    """
    h = pl.program_id(0) % num_heads

    q = q_ref[0]            # (tn, D)   bf16 by default — no f32 materialization
    attn = attn_ref[0]      # (tn, K)
    v = v_ref[0]            # (tn, D*K) dominant stream, stays in compute dtype
    tok = tok_ref[h]        # (D, K)
    bias = bias_ref[h]      # (1, K)    f32

    # attention weights: single-pass bf16 MXU matmul with f32 accumulation, f32 adds.
    a32 = jnp.dot(q, tok, preferred_element_type=jnp.float32)      # (tn, K)
    a32 = a32 + bias + attn.astype(jnp.float32)
    a = a32.astype(v.dtype)                                         # back to compute dtype

    # a_tiled[n, d*K + k] = a[n, k]  (exact: one 1.0 per column of the routing matrix).
    a_tiled = jnp.dot(a, expand_ref[...],
                      preferred_element_type=jnp.float32).astype(v.dtype)   # (tn, D*K)

    # out[n, d] = sum_k a[n, k] * v[n, d*K + k]  ==  ((a_tiled * v) @ R)[n, d]
    out = jnp.dot(a_tiled * v, reduce_ref[...],
                  preferred_element_type=jnp.float32)                       # (tn, D)

    o_ref[0] = out.astype(o_ref.dtype)


def swattention_av_pallas(q_norm, attn_local, v_local, learnable_tokens,
                          learnable_bias, *, compute_dtype=jnp.bfloat16,
                          out_dtype=None, tile_n=None):
    B, H, N, D = q_norm.shape
    K = attn_local.shape[-1]
    assert v_local.shape == (B, H, N, D, K)
    assert learnable_tokens.shape == (H, D, K)
    assert learnable_bias.shape == (H, 1, K)
    DK = D * K

    if out_dtype is None:
        out_dtype = q_norm.dtype
    if compute_dtype is None:
        compute_dtype = q_norm.dtype

    in_itemsize = jnp.dtype(compute_dtype).itemsize
    out_itemsize = jnp.dtype(out_dtype).itemsize
    if tile_n is None:
        tile_n = _pick_tile_n(N, D, K, in_itemsize, out_itemsize)

    # Free reshapes: collapse (B, H) into one parallel grid axis; flatten (D, K) of v_local
    # so its lane axis is dense.  The astype is a no-op when the caller (the real TransNeXt
    # pipeline) already produces the activations in compute_dtype.
    q2 = q_norm.reshape(B * H, N, D).astype(compute_dtype)
    attn2 = attn_local.reshape(B * H, N, K).astype(compute_dtype)
    v2 = v_local.reshape(B * H, N, DK).astype(compute_dtype)
    tok = learnable_tokens.astype(compute_dtype)
    bias = learnable_bias.astype(jnp.float32)

    # Tiny 0/1 routing matrices (exact in bf16; kept resident in VMEM).
    j = jnp.arange(DK, dtype=jnp.int32)
    expand_mat = (j[None, :] % K == jnp.arange(K, dtype=jnp.int32)[:, None]).astype(compute_dtype)
    reduce_mat = (j[:, None] // K == jnp.arange(D, dtype=jnp.int32)[None, :]).astype(compute_dtype)

    grid = (B * H, pl.cdiv(N, tile_n))
    kernel = functools.partial(_swattention_av_kernel, num_heads=H)

    est = (tile_n * _per_token_bytes(D, K, in_itemsize, out_itemsize)
           + _resident_bytes(H, D, K, in_itemsize))
    vmem_limit = max(32 * 1024 * 1024,
                     min(_VMEM_REQUEST_CAP, int(1.3 * est) + (2 << 20)))

    out2 = pl.pallas_call(
        kernel,
        out_shape=jax.ShapeDtypeStruct((B * H, N, D), out_dtype),
        grid_spec=pltpu.PrefetchScalarGridSpec(
            num_scalar_prefetch=0,
            grid=grid,
            in_specs=[
                pl.BlockSpec((1, tile_n, D), lambda bh, n: (bh, n, 0)),
                pl.BlockSpec((1, tile_n, K), lambda bh, n: (bh, n, 0)),
                pl.BlockSpec((1, tile_n, DK), lambda bh, n: (bh, n, 0)),
                pl.BlockSpec((H, D, K), lambda bh, n: (0, 0, 0)),   # resident params
                pl.BlockSpec((H, 1, K), lambda bh, n: (0, 0, 0)),
                pl.BlockSpec((K, DK), lambda bh, n: (0, 0)),        # resident routing mats
                pl.BlockSpec((DK, D), lambda bh, n: (0, 0)),
            ],
            out_specs=pl.BlockSpec((1, tile_n, D), lambda bh, n: (bh, n, 0)),
        ),
        compiler_params=pltpu.CompilerParams(
            dimension_semantics=("parallel", "parallel"),
            vmem_limit_bytes=vmem_limit,
        ),
    )(q2, attn2, v2, tok, bias, expand_mat, reduce_mat)

    return out2.reshape(B, H, N, D)


if __name__ == "__main__":
    key = jax.random.PRNGKey(0)
    B, num_heads, head_dim = 2, 2, 32
    Himg = Wimg = 8
    N = Himg * Wimg
    window_size = 3
    K = window_size * window_size

    k1, k2, k3, k4, k5 = jax.random.split(key, 5)
    # Activations (what the surrounding TransNeXt block would feed in).
    q_norm = jax.random.normal(k1, (B, num_heads, N, head_dim), jnp.float32)
    attn_local = jax.random.normal(k2, (B, num_heads, N, K), jnp.float32)
    v_local = jax.random.normal(k3, (B, num_heads, N, head_dim, K), jnp.float32)
    # Parameters: same shapes as TransNeXt's nn.Parameter tensors, deterministic init.
    learnable_tokens = 0.02 * jax.random.normal(k4, (num_heads, head_dim, K), jnp.float32)
    learnable_bias = 0.02 * jax.random.normal(k5, (num_heads, 1, K), jnp.float32)

    # Feed the dominant streams in bf16 (what the producer would emit in a bf16 pipeline),
    # avoiding an extra HBM cast pass in front of the kernel.
    cd = jnp.bfloat16
    q_bf = q_norm.astype(cd)
    attn_bf = attn_local.astype(cd)
    v_bf = v_local.astype(cd)

    out = swattention_av_pallas(q_bf, attn_bf, v_bf, learnable_tokens, learnable_bias,
                                compute_dtype=cd, out_dtype=jnp.float32)
    out = jax.block_until_ready(out)

    # Pure-JAX reference of the PyTorch fallback (swattention_av), mirroring the kernel's
    # bf16 quantization points so the check validates the kernel math itself.
    hp = jax.lax.Precision.HIGHEST
    a_ref = (jnp.einsum('bhnd,hdk->bhnk',
                        q_bf.astype(jnp.float32),
                        learnable_tokens.astype(cd).astype(jnp.float32), precision=hp)
             + learnable_bias[None] + attn_bf.astype(jnp.float32))
    a_ref = a_ref.astype(cd)
    prod = (a_ref[:, :, :, None, :] * v_bf).astype(jnp.float32)
    ref = prod.sum(-1)

    assert out.shape == (B, num_heads, N, head_dim)
    max_err = float(jnp.max(jnp.abs(out - ref)))
    assert jnp.allclose(out, ref, atol=0.15, rtol=0.05), f"mismatch vs reference (max abs err {max_err})"
    print("KERNEL_OK")
</pallas_src>

<mosaic_0001>
module attributes {stable_mosaic.version = 11 : i64} {
  func.func @_swattention_av_kernel(%arg0: i32, %arg1: i32, %arg2: memref<1x64x32xbf16, #tpu.memory_space<vmem>>, %arg3: memref<1x64x9xbf16, #tpu.memory_space<vmem>>, %arg4: memref<1x64x288xbf16, #tpu.memory_space<vmem>>, %arg5: memref<2x32x9xbf16, #tpu.memory_space<vmem>>, %arg6: memref<2x1x9xf32, #tpu.memory_space<vmem>>, %arg7: memref<9x288xbf16, #tpu.memory_space<vmem>>, %arg8: memref<288x32xbf16, #tpu.memory_space<vmem>>, %arg9: memref<1x64x32xf32, #tpu.memory_space<vmem>>) attributes {dimension_semantics = [#tpu.dimension_semantics<parallel>, #tpu.dimension_semantics<parallel>], iteration_bounds = array<i64: 4, 1>, scalar_prefetch = 0 : i64, scratch_operands = 0 : i64, tpu.core_type = #tpu.core_type<tc>, window_params = [{transform_indices = @transform_0, window_bounds = array<i64: 1, 64, 32>}, {transform_indices = @transform_1, window_bounds = array<i64: 1, 64, 9>}, {transform_indices = @transform_2, window_bounds = array<i64: 1, 64, 288>}, {pipeline_mode = #tpu.pipeline_mode<synchronous>, transform_indices = @transform_3, window_bounds = array<i64: 2, 32, 9>}, {pipeline_mode = #tpu.pipeline_mode<synchronous>, transform_indices = @transform_4, window_bounds = array<i64: 2, 1, 9>}, {pipeline_mode = #tpu.pipeline_mode<synchronous>, transform_indices = @transform_5, window_bounds = array<i64: 9, 288>}, {pipeline_mode = #tpu.pipeline_mode<synchronous>, transform_indices = @transform_6, window_bounds = array<i64: 288, 32>}, {transform_indices = @transform_7, window_bounds = array<i64: 1, 64, 32>}]} {
    %c2_i32 = arith.constant 2 : i32
    %c0_i32 = arith.constant 0 : i32
    %0 = arith.cmpi eq, %c2_i32, %c0_i32 : i32
    %c1_i32 = arith.constant 1 : i32
    %1 = arith.select %0, %c1_i32, %c2_i32 : i32
    %2 = arith.remsi %arg0, %1 : i32
    %c0_i32_0 = arith.constant 0 : i32
    %3 = arith.cmpi ne, %2, %c0_i32_0 : i32
    %c0_i32_1 = arith.constant 0 : i32
    %4 = arith.cmpi slt, %2, %c0_i32_1 : i32
    %c0_i32_2 = arith.constant 0 : i32
    %5 = arith.cmpi slt, %1, %c0_i32_2 : i32
    %6 = arith.xori %4, %5 : i1
    %7 = arith.andi %6, %3 : i1
    %8 = arith.addi %2, %1 : i32
    %9 = arith.select %7, %8, %2 : i32
    %c0 = arith.constant 0 : index
    %c0_3 = arith.constant 0 : index
    %c0_4 = arith.constant 0 : index
    %10 = vector.load %arg2[%c0, %c0_3, %c0_4] : memref<1x64x32xbf16, #tpu.memory_space<vmem>>, vector<1x64x32xbf16>
    %11 = vector.shape_cast %10 : vector<1x64x32xbf16> to vector<64x32xbf16>
    %c0_5 = arith.constant 0 : index
    %c0_6 = arith.constant 0 : index
    %c0_7 = arith.constant 0 : index
    %12 = vector.load %arg3[%c0_5, %c0_6, %c0_7] : memref<1x64x9xbf16, #tpu.memory_space<vmem>>, vector<1x64x9xbf16>
    %13 = vector.shape_cast %12 : vector<1x64x9xbf16> to vector<64x9xbf16>
    %c0_8 = arith.constant 0 : index
    %c0_9 = arith.constant 0 : index
    %c0_10 = arith.constant 0 : index
    %14 = vector.load %arg4[%c0_8, %c0_9, %c0_10] : memref<1x64x288xbf16, #tpu.memory_space<vmem>>, vector<1x64x288xbf16>
    %15 = vector.shape_cast %14 : vector<1x64x288xbf16> to vector<64x288xbf16>
    %16 = arith.index_cast %9 : i32 to index
    %c0_11 = arith.constant 0 : index
    %c0_12 = arith.constant 0 : index
    %17 = vector.load %arg5[%16, %c0_11, %c0_12] : memref<2x32x9xbf16, #tpu.memory_space<vmem>>, vector<1x32x9xbf16>
    %18 = vector.shape_cast %17 : vector<1x32x9xbf16> to vector<32x9xbf16>
    %19 = arith.index_cast %9 : i32 to index
    %c0_13 = arith.constant 0 : index
    %c0_14 = arith.constant 0 : index
    %20 = vector.load %arg6[%19, %c0_13, %c0_14] : memref<2x1x9xf32, #tpu.memory_space<vmem>>, vector<1x1x9xf32>
    %21 = vector.shape_cast %20 : vector<1x1x9xf32> to vector<1x9xf32>
    %cst = arith.constant dense<0.000000e+00> : vector<64x9xf32>
    %22 = tpu.matmul %11, %18, %cst {dimension_numbers = #tpu.dot_dimension_numbers<[1], [0], [0], [1], [0, 0, 1, 1], [], []>} : vector<64x32xbf16>, vector<32x9xbf16>, vector<64x9xf32> -> vector<64x9xf32>
    %23 = vector.broadcast %21 : vector<1x9xf32> to vector<64x9xf32>
    %24 = arith.addf %22, %23 : vector<64x9xf32>
    %25 = arith.extf %13 : vector<64x9xbf16> to vector<64x9xf32>
    %26 = arith.addf %24, %25 : vector<64x9xf32>
    %27 = arith.truncf %26 : vector<64x9xf32> to vector<64x9xbf16>
    %c0_15 = arith.constant 0 : index
    %c0_16 = arith.constant 0 : index
    %28 = vector.load %arg7[%c0_15, %c0_16] : memref<9x288xbf16, #tpu.memory_space<vmem>>, vector<9x288xbf16>
    %cst_17 = arith.constant dense<0.000000e+00> : vector<64x288xf32>
    %29 = tpu.matmul %27, %28, %cst_17 {dimension_numbers = #tpu.dot_dimension_numbers<[1], [0], [0], [1], [0, 0, 1, 1], [], []>} : vector<64x9xbf16>, vector<9x288xbf16>, vector<64x288xf32> -> vector<64x288xf32>
    %30 = arith.truncf %29 : vector<64x288xf32> to vector<64x288xbf16>
    %31 = arith.mulf %30, %15 : vector<64x288xbf16>
    %c0_18 = arith.constant 0 : index
    %c0_19 = arith.constant 0 : index
    %32 = vector.load %arg8[%c0_18, %c0_19] : memref<288x32xbf16, #tpu.memory_space<vmem>>, vector<288x32xbf16>
    %cst_20 = arith.constant dense<0.000000e+00> : vector<64x32xf32>
    %33 = tpu.matmul %31, %32, %cst_20 {dimension_numbers = #tpu.dot_dimension_numbers<[1], [0], [0], [1], [0, 0, 1, 1], [], []>} : vector<64x288xbf16>, vector<288x32xbf16>, vector<64x32xf32> -> vector<64x32xf32>
    %c0_21 = arith.constant 0 : index
    %c0_22 = arith.constant 0 : index
    %c0_23 = arith.constant 0 : index
    %34 = vector.load %arg9[%c0_21, %c0_22, %c0_23] : memref<1x64x32xf32, #tpu.memory_space<vmem>>, vector<1x64x32xf32>
    %35 = vector.shape_cast %34 : vector<1x64x32xf32> to vector<64x32xf32>
    %36 = vector.shape_cast %33 : vector<64x32xf32> to vector<1x64x32xf32>
    tpu.vector_store %arg9[%c0_21, %c0_22, %c0_23], %36 {strides = array<i32>} : memref<1x64x32xf32, #tpu.memory_space<vmem>>, vector<1x64x32xf32>,
    return
  }
  func.func @transform_0(%arg0: i32, %arg1: i32) -> (i32, i32, i32) {
    %c0_i32 = arith.constant 0 : i32
    %c0_i32_0 = arith.constant 0 : i32
    return %arg0, %arg1, %c0_i32 : i32, i32, i32
  }
  func.func @transform_1(%arg0: i32, %arg1: i32) -> (i32, i32, i32) {
    %c0_i32 = arith.constant 0 : i32
    %c0_i32_0 = arith.constant 0 : i32
    return %arg0, %arg1, %c0_i32 : i32, i32, i32
  }
  func.func @transform_2(%arg0: i32, %arg1: i32) -> (i32, i32, i32) {
    %c0_i32 = arith.constant 0 : i32
    %c0_i32_0 = arith.constant 0 : i32
    return %arg0, %arg1, %c0_i32 : i32, i32, i32
  }
  func.func @transform_3(%arg0: i32, %arg1: i32) -> (i32, i32, i32) {
    %c0_i32 = arith.constant 0 : i32
    %c0_i32_0 = arith.constant 0 : i32
    %c0_i32_1 = arith.constant 0 : i32
    %c0_i32_2 = arith.constant 0 : i32
    return %c0_i32, %c0_i32_0, %c0_i32_1 : i32, i32, i32
  }
  func.func @transform_4(%arg0: i32, %arg1: i32) -> (i32, i32, i32) {
    %c0_i32 = arith.constant 0 : i32
    %c0_i32_0 = arith.constant 0 : i32
    %c0_i32_1 = arith.constant 0 : i32
    %c0_i32_2 = arith.constant 0 : i32
    return %c0_i32, %c0_i32_0, %c0_i32_1 : i32, i32, i32
  }
  func.func @transform_5(%arg0: i32, %arg1: i32) -> (i32, i32) {
    %c0_i32 = arith.constant 0 : i32
    %c0_i32_0 = arith.constant 0 : i32
    %c0_i32_1 = arith.constant 0 : i32
    return %c0_i32, %c0_i32_0 : i32, i32
  }
  func.func @transform_6(%arg0: i32, %arg1: i32) -> (i32, i32) {
    %c0_i32 = arith.constant 0 : i32
    %c0_i32_0 = arith.constant 0 : i32
    %c0_i32_1 = arith.constant 0 : i32
    return %c0_i32, %c0_i32_0 : i32, i32
  }
  func.func @transform_7(%arg0: i32, %arg1: i32) -> (i32, i32, i32) {
    %c0_i32 = arith.constant 0 : i32
    %c0_i32_0 = arith.constant 0 : i32
    return %arg0, %arg1, %c0_i32 : i32, i32, i32
  }
}

</mosaic_0001>

<llo_original>
// kernel: tpu_custom_call.1
$region0: #{tpu_custom_call.1}
  #allocation0 [shape = 'u32[]', space=smem, size = 0x4, offset = 0x4, fixed_abs, tag = 'smem constant byte address 0x4 - core index']
  #allocation1 [shape = 'u32[144,128]{1,0:T(1,128)}', space=vmem, size = 0x12000, scoped, tag = 'internal scratch']
  %s0 = inlined_call_operand.vmem [shape: bf16[4,64,32], index: 0, kind: input, shape index: {}]
  %s1 = inlined_call_operand.vmem [shape: bf16[4,64,9], index: 1, kind: input, shape index: {}]
  %s2 = inlined_call_operand.vmem [shape: bf16[4,64,288], index: 2, kind: input, shape index: {}]
  %s3 = inlined_call_operand.vmem [shape: bf16[2,32,9], index: 3, kind: input, shape index: {}]
  %s4 = inlined_call_operand.vmem [shape: f32[2,1,9], index: 4, kind: input, shape index: {}]
  %s5 = inlined_call_operand.vmem [shape: bf16[9,288], index: 5, kind: input, shape index: {}]
  %s6 = inlined_call_operand.vmem [shape: bf16[288,32], index: 6, kind: input, shape index: {}]
  %s7 = inlined_call_operand.vmem [shape: f32[4,64,32], index: 7, kind: output, shape index: {}]
  %s8 = sld [smem:[#allocation0]]
  $region61: #{tpu_custom_call.1} parent=0
    _
  %s10 = ssub.s32 1, %s8
  %s11 = scalar_select 0, %s10, %s8
  loop: start=0, step=1, limit=6
  $region2: #{tpu_custom_call.1} parent=0 // loop_pre_header
    _
  $region3: #{tpu_custom_call.1} parent=0 // loop_header
    %s13 = sphi 0, %s17
    %p14 = scmp.ge.s32.totalorder %s13, 6
    %s20 = sphi 0, %s32
    %s21 = sphi 0, %s28
    %s22 = sphi 0, %s20
    %s23 = sphi 0, %s21
    %s24 = sphi 0, %s22
    %s25 = sphi 0, %s23
    %s37 = sphi 0, %s39
    %s40 = sphi 0, %s37
    %s41 = sphi 0, %s40
    %s57 = sphi 0, %s41
    %s65 = sphi 0, %s67
    %s68 = sphi 0, %s65
    %s69 = sphi 0, %s68
    %s85 = sphi 0, %s69
    %s93 = sphi 0, %s95
    %s96 = sphi 0, %s93
    %s97 = sphi 0, %s96
    %s113 = sphi 0, %s97
    %s117 = sphi 0, %s117
    %s119 = sphi 0, %s117
    %s120 = sphi 0, %s119
    %s134 = sphi 0, %s120
    %s138 = sphi 0, %s138
    %s140 = sphi 0, %s138
    %s141 = sphi 0, %s140
    %s155 = sphi 0, %s141
    %s159 = sphi 0, %s159
    %s161 = sphi 0, %s159
    %s162 = sphi 0, %s161
    %s176 = sphi 0, %s162
    %s180 = sphi 0, %s180
    %s182 = sphi 0, %s180
    %s183 = sphi 0, %s182
    %s197 = sphi 0, %s183
    %s205 = sphi 0, %s207
    %s208 = sphi 0, %s205
    %s209 = sphi 0, %s208
    %s225 = sphi 0, %s209
  $region4: #{tpu_custom_call.1} parent=0 // loop_header_branch
    %16 = sbr.rel (%p14) target = $region8
  $region5: #{tpu_custom_call.1} parent=0 // loop_body
    %s18 = ssub.s32 %s13, 1
    %s19 = ssub.s32 %s13, 2
    %s26 = sadd.s32 1, %s21
    %p27 = scmp.ge.s32.totalorder %s26, 1
    %s28 = scalar_select %p27, 0, %s26
    %s29 = sadd.s32 1, %s20
    %s30 = scalar_select %p27, %s29, %s20
    %p31 = scmp.ge.s32.totalorder %s30, 4
    %s32 = scalar_select %p31, 0, %s30
    %s33 = ssub.s32 %s20, %s32
    %s34 = ssub.s32 %s21, %s28
    %s35 = sor.u32 %s33, %s34
    %p36 = scmp.eq.s32.totalorder %s35, 0
    %s38 = sadd.s32 %s37, 1
    %s39 = scalar_select %p36, %s37, %s38
    %p42 = pneg %p36
    %p43 = scmp.eq.s32.totalorder %s13, 3
    %p44 = por %p42, %p43
    %p45 = scmp.ne.s32.totalorder %s37, %s40
    %p46 = scmp.eq.s32.totalorder %s13, 0
    %p47 = por %p45, %p46
    %p48 = scmp.ne.s32.totalorder %s37, %s40
    %p49 = scmp.eq.s32.totalorder %s18, 3
    %p50 = por %p48, %p49
    %p51 = scmp.ne.s32.totalorder %s40, %s41
    %p52 = scmp.eq.s32.totalorder %s18, 0
    %p53 = por %p51, %p52
    %p54 = scmp.ne.s32.totalorder %s40, %s41
    %p55 = scmp.eq.s32.totalorder %s19, 3
    %p56 = por %p54, %p55
    %p58 = scmp.ne.s32.totalorder %s41, %s57
    %p59 = scmp.eq.s32.totalorder %s19, 0
    %p60 = por %p58, %p59
    %s61 = ssub.s32 %s20, %s32
    %s62 = ssub.s32 %s21, %s28
    %s63 = sor.u32 %s61, %s62
    %p64 = scmp.eq.s32.totalorder %s63, 0
    %s66 = sadd.s32 %s65, 1
    %s67 = scalar_select %p64, %s65, %s66
    %p70 = pneg %p64
    %p71 = scmp.eq.s32.totalorder %s13, 3
    %p72 = por %p70, %p71
    %p73 = scmp.ne.s32.totalorder %s65, %s68
    %p74 = scmp.eq.s32.totalorder %s13, 0
    %p75 = por %p73, %p74
    %p76 = scmp.ne.s32.totalorder %s65, %s68
    %p77 = scmp.eq.s32.totalorder %s18, 3
    %p78 = por %p76, %p77
    %p79 = scmp.ne.s32.totalorder %s68, %s69
    %p80 = scmp.eq.s32.totalorder %s18, 0
    %p81 = por %p79, %p80
    %p82 = scmp.ne.s32.totalorder %s68, %s69
    %p83 = scmp.eq.s32.totalorder %s19, 3
    %p84 = por %p82, %p83
    %p86 = scmp.ne.s32.totalorder %s69, %s85
    %p87 = scmp.eq.s32.totalorder %s19, 0
    %p88 = por %p86, %p87
    %s89 = ssub.s32 %s20, %s32
    %s90 = ssub.s32 %s21, %s28
    %s91 = sor.u32 %s89, %s90
    %p92 = scmp.eq.s32.totalorder %s91, 0
    %s94 = sadd.s32 %s93, 1
    %s95 = scalar_select %p92, %s93, %s94
    %p98 = pneg %p92
    %p99 = scmp.eq.s32.totalorder %s13, 3
    %p100 = por %p98, %p99
    %p101 = scmp.ne.s32.totalorder %s93, %s96
    %p102 = scmp.eq.s32.totalorder %s13, 0
    %p103 = por %p101, %p102
    %p104 = scmp.ne.s32.totalorder %s93, %s96
    %p105 = scmp.eq.s32.totalorder %s18, 3
    %p106 = por %p104, %p105
    %p107 = scmp.ne.s32.totalorder %s96, %s97
    %p108 = scmp.eq.s32.totalorder %s18, 0
    %p109 = por %p107, %p108
    %p110 = scmp.ne.s32.totalorder %s96, %s97
    %p111 = scmp.eq.s32.totalorder %s19, 3
    %p112 = por %p110, %p111
    %p114 = scmp.ne.s32.totalorder %s97, %s113
    %p115 = scmp.eq.s32.totalorder %s19, 0
    %p116 = por %p114, %p115
    %s118 = sadd.s32 %s117, 1
    %p121 = scmp.eq.s32.totalorder %s13, 3
    %p122 = scmp.ne.s32.totalorder %s117, %s119
    %p123 = scmp.eq.s32.totalorder %s13, 0
    %p124 = por %p122, %p123
    %p125 = scmp.ne.s32.totalorder %s117, %s119
    %p126 = scmp.eq.s32.totalorder %s18, 3
    %p127 = por %p125, %p126
    %p128 = scmp.ne.s32.totalorder %s119, %s120
    %p129 = scmp.eq.s32.totalorder %s18, 0
    %p130 = por %p128, %p129
    %p131 = scmp.ne.s32.totalorder %s119, %s120
    %p132 = scmp.eq.s32.totalorder %s19, 3
    %p133 = por %p131, %p132
    %p135 = scmp.ne.s32.totalorder %s120, %s134
    %p136 = scmp.eq.s32.totalorder %s19, 0
    %p137 = por %p135, %p136
    %s139 = sadd.s32 %s138, 1
    %p142 = scmp.eq.s32.totalorder %s13, 3
    %p143 = scmp.ne.s32.totalorder %s138, %s140
    %p144 = scmp.eq.s32.totalorder %s13, 0
    %p145 = por %p143, %p144
    %p146 = scmp.ne.s32.totalorder %s138, %s140
    %p147 = scmp.eq.s32.totalorder %s18, 3
    %p148 = por %p146, %p147
    %p149 = scmp.ne.s32.totalorder %s140, %s141
    %p150 = scmp.eq.s32.totalorder %s18, 0
    %p151 = por %p149, %p150
    %p152 = scmp.ne.s32.totalorder %s140, %s141
    %p153 = scmp.eq.s32.totalorder %s19, 3
    %p154 = por %p152, %p153
    %p156 = scmp.ne.s32.totalorder %s141, %s155
    %p157 = scmp.eq.s32.totalorder %s19, 0
    %p158 = por %p156, %p157
    %s160 = sadd.s32 %s159, 1
    %p163 = scmp.eq.s32.totalorder %s13, 3
    %p164 = scmp.ne.s32.totalorder %s159, %s161
    %p165 = scmp.eq.s32.totalorder %s13, 0
    %p166 = por %p164, %p165
    %p167 = scmp.ne.s32.totalorder %s159, %s161
    %p168 = scmp.eq.s32.totalorder %s18, 3
    %p169 = por %p167, %p168
    %p170 = scmp.ne.s32.totalorder %s161, %s162
    %p171 = scmp.eq.s32.totalorder %s18, 0
    %p172 = por %p170, %p171
    %p173 = scmp.ne.s32.totalorder %s161, %s162
    %p174 = scmp.eq.s32.totalorder %s19, 3
    %p175 = por %p173, %p174
    %p177 = scmp.ne.s32.totalorder %s162, %s176
    %p178 = scmp.eq.s32.totalorder %s19, 0
    %p179 = por %p177, %p178
    %s181 = sadd.s32 %s180, 1
    %p184 = scmp.eq.s32.totalorder %s13, 3
    %p185 = scmp.ne.s32.totalorder %s180, %s182
    %p186 = scmp.eq.s32.totalorder %s13, 0
    %p187 = por %p185, %p186
    %p188 = scmp.ne.s32.totalorder %s180, %s182
    %p189 = scmp.eq.s32.totalorder %s18, 3
    %p190 = por %p188, %p189
    %p191 = scmp.ne.s32.totalorder %s182, %s183
    %p192 = scmp.eq.s32.totalorder %s18, 0
    %p193 = por %p191, %p192
    %p194 = scmp.ne.s32.totalorder %s182, %s183
    %p195 = scmp.eq.s32.totalorder %s19, 3
    %p196 = por %p194, %p195
    %p198 = scmp.ne.s32.totalorder %s183, %s197
    %p199 = scmp.eq.s32.totalorder %s19, 0
    %p200 = por %p198, %p199
    %s201 = ssub.s32 %s20, %s32
    %s202 = ssub.s32 %s21, %s28
    %s203 = sor.u32 %s201, %s202
    %p204 = scmp.eq.s32.totalorder %s203, 0
    %s206 = sadd.s32 %s205, 1
    %s207 = scalar_select %p204, %s205, %s206
    %p210 = pneg %p204
    %p211 = scmp.eq.s32.totalorder %s13, 3
    %p212 = por %p210, %p211
    %p213 = scmp.ne.s32.totalorder %s205, %s208
    %p214 = scmp.eq.s32.totalorder %s13, 0
    %p215 = por %p213, %p214
    %p216 = scmp.ne.s32.totalorder %s205, %s208
    %p217 = scmp.eq.s32.totalorder %s18, 3
    %p218 = por %p216, %p217
    %p219 = scmp.ne.s32.totalorder %s208, %s209
    %p220 = scmp.eq.s32.totalorder %s18, 0
    %p221 = por %p219, %p220
    %p222 = scmp.ne.s32.totalorder %s208, %s209
    %p223 = scmp.eq.s32.totalorder %s19, 3
    %p224 = por %p222, %p223
    %p226 = scmp.ne.s32.totalorder %s209, %s225
    %p227 = scmp.eq.s32.totalorder %s19, 0
    %p228 = por %p226, %p227
    %p229 = scmp.le.s32.totalorder 1, %s13
    %p230 = scmp.lt.s32.totalorder %s13, 5
    %p231 = pnand %p229, %p230
    %p232 = pneg %p231
    // Predicated region
    $region9: #{tpu_custom_call.1} parent=5 // pred_check
      _
    $region10: #{tpu_custom_call.1} parent=5 // pred_check_branch
      %234 = sbr.rel (%p231) target = $region12
    $region11: #{tpu_custom_call.1} parent=5 // pred_region
      %s235 = ssub.s32 %s13, 1
      // Predicated region
      $region13: #{tpu_custom_call.1} parent=11 // pred_check
        %p236 = pneg %p130
      $region14: #{tpu_custom_call.1} parent=11 // pred_check_branch
        %238 = sbr.rel (%p236) target = $region16
      $region15: #{tpu_custom_call.1} parent=11 // pred_region
        _
      $region16: #{tpu_custom_call.1} parent=11 // pred_fallthru
        _
      // Predicated region
      $region17: #{tpu_custom_call.1} parent=11 // pred_check
        %p239 = pneg %p151
      $region18: #{tpu_custom_call.1} parent=11 // pred_check_branch
        %241 = sbr.rel (%p239) target = $region20
      $region19: #{tpu_custom_call.1} parent=11 // pred_region
        _
      $region20: #{tpu_custom_call.1} parent=11 // pred_fallthru
        _
      // Predicated region
      $region21: #{tpu_custom_call.1} parent=11 // pred_check
        %p242 = pneg %p172
      $region22: #{tpu_custom_call.1} parent=11 // pred_check_branch
        %244 = sbr.rel (%p242) target = $region24
      $region23: #{tpu_custom_call.1} parent=11 // pred_region
        _
      $region24: #{tpu_custom_call.1} parent=11 // pred_fallthru
        _
      // Predicated region
      $region25: #{tpu_custom_call.1} parent=11 // pred_check
        %p245 = pneg %p193
      $region26: #{tpu_custom_call.1} parent=11 // pred_check_branch
        %247 = sbr.rel (%p245) target = $region28
      $region27: #{tpu_custom_call.1} parent=11 // pred_region
        _
      $region28: #{tpu_custom_call.1} parent=11 // pred_fallthru
        _
    $region12: #{tpu_custom_call.1} parent=5 // pred_fallthru
      _
    %p248 = scmp.lt.s32.totalorder %s13, 4
    // Predicated region
    $region29: #{tpu_custom_call.1} parent=5 // pred_check
      %p249 = pneg %p248
    $region30: #{tpu_custom_call.1} parent=5 // pred_check_branch
      %251 = sbr.rel (%p249) target = $region32
    $region31: #{tpu_custom_call.1} parent=5 // pred_region
      // Predicated region
      $region33: #{tpu_custom_call.1} parent=31 // pred_check
        %p252 = pneg %p47
      $region34: #{tpu_custom_call.1} parent=31 // pred_check_branch
        %254 = sbr.rel (%p252) target = $region36
      $region35: #{tpu_custom_call.1} parent=31 // pred_region
        %s255 = smul.u32 8, %s21
        %p256 = scmp.lt.s32.totalorder %s20, 3
        %s257 = scalar_select %p256, %s20, 3
        %p258 = scmp.lt.s32.totalorder %s255, 7
        %s259 = scalar_select %p258, %s255, 7
        %s260 = smul.addr %s257, 8
        %s261 = sadd.s32 %s259, %s260
        %s262 = smul.addr %s261, 4
        %s263 = scalar_lea.vmem %s0, %s262
        %s264 = smul.u32 8, %s21
      $region36: #{tpu_custom_call.1} parent=31 // pred_fallthru
        _
      // Predicated region
      $region37: #{tpu_custom_call.1} parent=31 // pred_check
        %p265 = pneg %p75
      $region38: #{tpu_custom_call.1} parent=31 // pred_check_branch
        %267 = sbr.rel (%p265) target = $region40
      $region39: #{tpu_custom_call.1} parent=31 // pred_region
        %s268 = smul.u32 8, %s21
        %p269 = scmp.lt.s32.totalorder %s20, 3
        %s270 = scalar_select %p269, %s20, 3
        %p271 = scmp.lt.s32.totalorder %s268, 7
        %s272 = scalar_select %p271, %s268, 7
        %s273 = smul.addr %s270, 8
        %s274 = sadd.s32 %s272, %s273
        %s275 = smul.addr %s274, 4
        %s276 = scalar_lea.vmem %s1, %s275
        %s277 = smul.u32 8, %s21
      $region40: #{tpu_custom_call.1} parent=31 // pred_fallthru
        _
      // Predicated region
      $region41: #{tpu_custom_call.1} parent=31 // pred_check
        %p278 = pneg %p103
      $region42: #{tpu_custom_call.1} parent=31 // pred_check_branch
        %280 = sbr.rel (%p278) target = $region44
      $region43: #{tpu_custom_call.1} parent=31 // pred_region
        %s281 = smul.u32 8, %s21
        %p282 = scmp.lt.s32.totalorder %s20, 3
        %s283 = scalar_select %p282, %s20, 3
        %p284 = scmp.lt.s32.totalorder %s281, 7
        %s285 = scalar_select %p284, %s281, 7
        %s286 = smul.addr %s285, 3
        %s287 = smul.addr %s283, 24
        %s288 = sadd.s32 %s286, %s287
        %s289 = smul.addr %s288, 4
        %s290 = scalar_lea.vmem %s2, %s289
        %s291 = smul.u32 8, %s21
      $region44: #{tpu_custom_call.1} parent=31 // pred_fallthru
        _
    $region32: #{tpu_custom_call.1} parent=5 // pred_fallthru
      _
    %p292 = scmp.le.s32.totalorder 1, %s13
    %p293 = scmp.lt.s32.totalorder %s13, 5
    %p294 = pnand %p292, %p293
    %p295 = pneg %p294
    // Predicated region
    $region45: #{tpu_custom_call.1} parent=5 // pred_check
      _
    $region46: #{tpu_custom_call.1} parent=5 // pred_check_branch
      %297 = sbr.rel (%p294) target = $region48
    $region47: #{tpu_custom_call.1} parent=5 // pred_region
      %s298 = ssub.s32 %s13, 1
      %s299 = smul.u32 8, %s23
      %p300 = scmp.lt.s32.totalorder %s22, 3
      %s301 = scalar_select %p300, %s22, 3
      %p302 = scmp.lt.s32.totalorder %s299, 7
      %s303 = scalar_select %p302, %s299, 7
      %s304 = smul.addr %s301, 8
      %s305 = sadd.s32 %s303, %s304
      %s306 = smul.addr %s305, 4
      %s307 = scalar_lea.vmem %s0, %s306
      %p308 = pneg %p53
      %p309 = pneg %p50
      %s310 = smul.u32 8, %s23
      %p311 = scmp.lt.s32.totalorder %s22, 3
      %s312 = scalar_select %p311, %s22, 3
      %p313 = scmp.lt.s32.totalorder %s310, 7
      %s314 = scalar_select %p313, %s310, 7
      %s315 = smul.addr %s312, 8
      %s316 = sadd.s32 %s314, %s315
      %s317 = smul.addr %s316, 4
      %s318 = scalar_lea.vmem %s1, %s317
      %p319 = pneg %p81
      %p320 = pneg %p78
      %s321 = smul.u32 8, %s23
      %p322 = scmp.lt.s32.totalorder %s22, 3
      %s323 = scalar_select %p322, %s22, 3
      %p324 = scmp.lt.s32.totalorder %s321, 7
      %s325 = scalar_select %p324, %s321, 7
      %s326 = smul.addr %s325, 3
      %s327 = smul.addr %s323, 24
      %s328 = sadd.s32 %s326, %s327
      %s329 = smul.addr %s328, 4
      %s330 = scalar_lea.vmem %s2, %s329
      %p331 = pneg %p109
      %p332 = pneg %p106
      %p333 = pneg %p130
      %p334 = pneg %p127
      %p335 = pneg %p151
      %p336 = pneg %p148
      %p337 = pneg %p172
      %p338 = pneg %p169
      %p339 = pneg %p193
      %p340 = pneg %p190
      %p341 = pneg %p221
      %p342 = pneg %p218
      %s343 = smul.u32 8, %s23
      %p344 = scmp.lt.s32.totalorder %s22, 3
      %s345 = scalar_select %p344, %s22, 3
      %p346 = scmp.lt.s32.totalorder %s343, 7
      %s347 = scalar_select %p346, %s343, 7
      %s348 = smul.addr %s345, 8
      %s349 = sadd.s32 %s347, %s348
      %s350 = smul.addr %s349, 8
      %s351 = scalar_lea.vmem %s7, %s350
      %s352 = smul.u32 8, %s23
      %p353 = scmp.lt.s32.totalorder %s22, 3
      %s354 = scalar_select %p353, %s22, 3
      %p355 = scmp.lt.s32.totalorder %s352, 7
      %s356 = scalar_select %p355, %s352, 7
      %s357 = smul.addr %s354, 8
      %s358 = sadd.s32 %s356, %s357
      %s359 = smul.addr %s358, 4
      %s360 = scalar_lea.vmem %s0, %s359
      %s361 = smul.u32 8, %s23
      %s362 = smul.u32 8, %s23
      %p363 = scmp.lt.s32.totalorder %s22, 3
      %s364 = scalar_select %p363, %s22, 3
      %p365 = scmp.lt.s32.totalorder %s362, 7
      %s366 = scalar_select %p365, %s362, 7
      %s367 = smul.addr %s364, 8
      %s368 = sadd.s32 %s366, %s367
      %s369 = smul.addr %s368, 4
      %s370 = scalar_lea.vmem %s1, %s369
      %s371 = smul.u32 8, %s23
      %s372 = smul.u32 8, %s23
      %p373 = scmp.lt.s32.totalorder %s22, 3
      %s374 = scalar_select %p373, %s22, 3
      %p375 = scmp.lt.s32.totalorder %s372, 7
      %s376 = scalar_select %p375, %s372, 7
      %s377 = smul.addr %s376, 3
      %s378 = smul.addr %s374, 24
      %s379 = sadd.s32 %s377, %s378
      %s380 = smul.addr %s379, 4
      %s381 = scalar_lea.vmem %s2, %s380
      %s382 = smul.u32 8, %s23
      %s383 = smul.u32 8, %s23
      %p384 = scmp.lt.s32.totalorder %s22, 3
      %s385 = scalar_select %p384, %s22, 3
      %p386 = scmp.lt.s32.totalorder %s383, 7
      %s387 = scalar_select %p386, %s383, 7
      %s388 = smul.addr %s385, 8
      %s389 = sadd.s32 %s387, %s388
      %s390 = smul.addr %s389, 8
      %s391 = scalar_lea.vmem %s7, %s390
      %s392 = smul.u32 8, %s23
      %p394 = scmp.lt.s32.totalorder %s22, 0
      %s395 = ssub.s32 0, %s22
      %s396 = scalar_select %p394, %s395, %s22
      %s397 = sand.u32 %s396, 1
      %s398 = ssub.s32 0, %s397
      %s399 = scalar_select %p394, %s398, %s397
      %p400 = scmp.ne.s32.totalorder %s399, 0
      %p401 = scmp.lt.s32.totalorder %s399, 0
      %p402 = pnand %p401, %p400
      %p403 = pneg %p402
      %s404 = sadd.s32 %s399, 2
      %s405 = scalar_select %p403, %s404, %s399
      %v406 = vld [vmem:[%s360] sm:$0xf]
      %v407 = vld [vmem:[%s360 + $0x4] sm:$0xf]
      %v408 = vld [vmem:[%s360 + $0x8] sm:$0xf]
      %v409 = vld [vmem:[%s360 + $0xc] sm:$0xf]
      %v410 = vld [vmem:[%s360 + $0x10] sm:$0xf]
      %v411 = vld [vmem:[%s360 + $0x14] sm:$0xf]
      %v412 = vld [vmem:[%s360 + $0x18] sm:$0xf]
      %v413 = vld [vmem:[%s360 + $0x1c] sm:$0xf]
      %v414 = vld [vmem:[%s370] sm:$0xf]
      %v415 = vld [vmem:[%s370 + $0x4] sm:$0xf]
      %v416 = vld [vmem:[%s370 + $0x8] sm:$0xf]
      %v417 = vld [vmem:[%s370 + $0xc] sm:$0xf]
      %v418 = vld [vmem:[%s370 + $0x10] sm:$0xf]
      %v419 = vld [vmem:[%s370 + $0x14] sm:$0xf]
      %v420 = vld [vmem:[%s370 + $0x18] sm:$0xf]
      %v421 = vld [vmem:[%s370 + $0x1c] sm:$0xf]
      %v422 = vld [vmem:[%s381] sm:$0xff]
      %v423 = vld [vmem:[%s381 + $0x8] sm:$0xf]
      %v424 = vld [vmem:[%s381 + $0xc] sm:$0xff]
      %v425 = vld [vmem:[%s381 + $0x14] sm:$0xf]
      %v426 = vld [vmem:[%s381 + $0x18] sm:$0xff]
      %v427 = vld [vmem:[%s381 + $0x20] sm:$0xf]
      %v428 = vld [vmem:[%s381 + $0x24] sm:$0xff]
      %v429 = vld [vmem:[%s381 + $0x2c] sm:$0xf]
      %v430 = vld [vmem:[%s381 + $0x30] sm:$0xff]
      %v431 = vld [vmem:[%s381 + $0x38] sm:$0xf]
      %v432 = vld [vmem:[%s381 + $0x3c] sm:$0xff]
      %v433 = vld [vmem:[%s381 + $0x44] sm:$0xf]
      %v434 = vld [vmem:[%s381 + $0x48] sm:$0xff]
      %v435 = vld [vmem:[%s381 + $0x50] sm:$0xf]
      %v436 = vld [vmem:[%s381 + $0x54] sm:$0xff]
      %v437 = vld [vmem:[%s381 + $0x5c] sm:$0xf]
      %s438 = smul.u32 %s405, 4
      %s439 = smul.addr %s438, 4
      %s440 = scalar_lea.vmem %s3, %s439
      %v441 = vld [vmem:[%s440] sm:$0xf]
      %v442 = vld [vmem:[%s440 + $0x4] sm:$0xf]
      %v443 = vld [vmem:[%s440 + $0x8] sm:$0xf]
      %v444 = vld [vmem:[%s440 + $0xc] sm:$0xf]
      %s445 = scalar_lea.vmem %s4, %s405
      %v446 = vld [vmem:[%s445] sm:$0x1]
      %v448 = vlaneseq
      %v449 = vshrl.u32 %v448, 7
      %v450 = vsub.s32 0, %v449
      %v451 = vrot.slane %v446, %v450
      %v461 = vunpack.c.l.b16 %v406
      %v462 = vunpack.c.l.b16 %v407
      %v463 = vunpack.c.l.b16 %v408
      %v464 = vunpack.c.l.b16 %v409
      %v465 = vunpack.c.l.b16 %v410
      %v466 = vunpack.c.l.b16 %v411
      %v467 = vunpack.c.l.b16 %v412
      %v468 = vunpack.c.l.b16 %v413
      %v469 = vpack.c.b16 %v462, %v461
      %v470 = vpack.c.b16 %v464, %v463
      %v471 = vpack.c.b16 %v466, %v465
      %v472 = vpack.c.b16 %v468, %v467
      %v477 = vunpack.c.l.b16 %v441
      %v478 = vunpack.c.l.b16 %v442
      %v479 = vunpack.c.l.b16 %v443
      %v480 = vunpack.c.l.b16 %v444
      %v481 = vpack.c.b16 %v478, %v477
      %v482 = vpack.c.b16 %v480, %v479
      %vm485 = vcmask 261120
      %v487 = vsel %vm485, %v469, 0
      %v490 = vsel %vm485, %v470, 0
      %v493 = vsel %vm485, %v471, 0
      %v496 = vsel %vm485, %v472, 0
      %498 = vmatprep.subr.bf16.mxu0 0
      %499 = vmatpush1.bf16.msra.mxu0 0
      %500 = vmatprep.subr.bf16.mxu0 0
      %501 = vmatpush1.bf16.msra.mxu0 0
      %502 = vmatprep.subr.bf16.mxu0 0
      %503 = vmatpush1.bf16.msra.mxu0 0
      %504 = vmatprep.subr.bf16.mxu0 0
      %505 = vmatpush1.bf16.msra.mxu0 0
      %506 = vmatprep.subr.bf16.mxu0 0
      %507 = vmatpush1.bf16.msra.mxu0 0
      %508 = vmatprep.subr.bf16.mxu0 0
      %509 = vmatpush1.bf16.msra.mxu0 0
      %510 = vmatprep.subr.bf16.mxu0 0
      %511 = vmatpush1.bf16.msra.mxu0 %v482
      %512 = vmatprep.subr.bf16.mxu0 0
      %513 = vmatpush1.bf16.msra.mxu0 %v481
      %514 = vmatprep.subr.bf16.mxu0 0
      %515 = vmatpush2.bf16.msra.mxu0 0
      %516 = vmatprep.subr.bf16.mxu0 0
      %517 = vmatpush2.bf16.msra.mxu0 0
      %518 = vmatprep.subr.bf16.mxu0 0
      %519 = vmatpush2.bf16.msra.mxu0 0
      %520 = vmatprep.subr.bf16.mxu0 0
      %521 = vmatpush2.bf16.msra.mxu0 0
      %522 = vmatprep.subr.bf16.mxu0 0
      %523 = vmatpush2.bf16.msra.mxu0 0
      %524 = vmatprep.subr.bf16.mxu0 0
      %525 = vmatpush2.bf16.msra.mxu0 0
      %526 = vmatprep.subr.bf16.mxu0 0
      %527 = vmatpush2.bf16.msra.mxu0 0
      %528 = vmatprep.subr.bf16.mxu0 0
      %529 = vmatpush2.bf16.msra.mxu0 0
      %530 = vmatprep.mubr.bf16.mxu0 0
      %531 = vmatmul.mubr.bf16.gmra.mxu0 %v487
      %v532 = vpop.f32.mrf.mxu0
      %v533 = vadd.f32 %v451, %v532
      %v534 = vpop.f32.mrf.mxu0
      %v535 = vpop.f32.mrf.mxu0
      %v536 = vadd.f32 %v451, %v535
      %v537 = vpop.f32.mrf.mxu0
      %538 = vmatprep.mubr.bf16.mxu0 0
      %539 = vmatmul.mubr.bf16.gmra.mxu0 %v490
      %v540 = vpop.f32.mrf.mxu0
      %v541 = vadd.f32 %v451, %v540
      %v542 = vpop.f32.mrf.mxu0
      %v543 = vpop.f32.mrf.mxu0
      %v544 = vadd.f32 %v451, %v543
      %v545 = vpop.f32.mrf.mxu0
      %546 = vmatprep.mubr.bf16.mxu0 0
      %547 = vmatmul.mubr.bf16.gmra.mxu0 %v493
      %v548 = vpop.f32.mrf.mxu0
      %v549 = vadd.f32 %v451, %v548
      %v550 = vpop.f32.mrf.mxu0
      %v551 = vpop.f32.mrf.mxu0
      %v552 = vadd.f32 %v451, %v551
      %v553 = vpop.f32.mrf.mxu0
      %554 = vmatprep.mubr.bf16.mxu0 0
      %555 = vmatmul.mubr.bf16.gmra.mxu0 %v496
      %v556 = vpop.f32.mrf.mxu0
      %v557 = vadd.f32 %v451, %v556
      %v558 = vpop.f32.mrf.mxu0
      %v559 = vpop.f32.mrf.mxu0
      %v560 = vadd.f32 %v451, %v559
      %v561 = vpop.f32.mrf.mxu0
      %562 = vdwg.mxu0
      %v563 = vunpack.c.l.bf16 %v414
      %v564 = vunpack.c.l.bf16 %v415
      %v565 = vunpack.c.l.bf16 %v416
      %v566 = vunpack.c.l.bf16 %v417
      %v567 = vunpack.c.l.bf16 %v418
      %v568 = vunpack.c.l.bf16 %v419
      %v569 = vunpack.c.l.bf16 %v420
      %v570 = vunpack.c.l.bf16 %v421
      %v571 = vadd.f32 %v533, %v563
      %v572 = vadd.f32 %v536, %v564
      %v573 = vadd.f32 %v541, %v565
      %v574 = vadd.f32 %v544, %v566
      %v575 = vadd.f32 %v549, %v567
      %v576 = vadd.f32 %v552, %v568
      %v577 = vadd.f32 %v557, %v569
      %v578 = vadd.f32 %v560, %v570
      %v579 = vpack.c.bf16 %v572, %v571
      %v580 = vpack.c.bf16 %v574, %v573
      %v581 = vpack.c.bf16 %v576, %v575
      %v582 = vpack.c.bf16 %v578, %v577
      %v583 = vld [vmem:[%s5] sm:$0xff]
      %v584 = vld [vmem:[%s5 + $0x8] sm:$0xf]
      %v585 = vld [vmem:[%s5 + $0xc] sm:$0x11]
      %v586 = vld [vmem:[%s5 + $0x14] sm:$0x1]
      %v591 = vunpack.c.l.b16 %v583
      %v592 = vunpack.c.h.b16 %v583
      %v593 = vunpack.c.l.b16 %v584
      %v594 = vunpack.c.l.b16 %v585
      %v595 = vunpack.c.h.b16 %v585
      %v596 = vunpack.c.l.b16 %v586
      %v597 = vpack.c.b16 %v594, %v591
      %v598 = vpack.c.b16 %v595, %v592
      %v599 = vpack.c.b16 %v596, %v593
      %vm600 = vcmask 72704
      %v602 = vsel %vm600, %v579, 0
      %v605 = vsel %vm600, %v580, 0
      %v608 = vsel %vm600, %v581, 0
      %v611 = vsel %vm600, %v582, 0
      %vm613 = vcmask 1043456
      %vm614 = vcmask 1044480
      %v615 = vsel %vm613, 4294967295, 65535
      %v616 = vsel %vm614, %v615, 0
      %v618 = vand.u32 %v597, %v616
      %v621 = vand.u32 %v598, %v616
      %v624 = vand.u32 %v599, %v616
      %626 = vmatprep.subr.bf16.mxu0 0
      %627 = vmatpush1.bf16.msra.mxu0 0
      %628 = vmatprep.subr.bf16.mxu0 0
      %629 = vmatpush1.bf16.msra.mxu0 0
      %630 = vmatprep.subr.bf16.mxu0 0
      %631 = vmatpush1.bf16.msra.mxu0 0
      %632 = vmatprep.subr.bf16.mxu0 0
      %633 = vmatpush1.bf16.msra.mxu0 0
      %634 = vmatprep.subr.bf16.mxu0 0
      %635 = vmatpush1.bf16.msra.mxu0 0
      %636 = vmatprep.subr.bf16.mxu0 0
      %637 = vmatpush1.bf16.msra.mxu0 0
      %638 = vmatprep.subr.bf16.mxu0 0
      %639 = vmatpush1.bf16.msra.mxu0 0
      %640 = vmatprep.subr.bf16.mxu0 %v621
      %641 = vmatpush1.bf16.msra.mxu0 %v618
      %642 = vmatprep.subr.bf16.mxu0 0
      %643 = vmatpush2.bf16.msra.mxu0 0
      %644 = vmatprep.subr.bf16.mxu0 0
      %645 = vmatpush2.bf16.msra.mxu0 0
      %646 = vmatprep.subr.bf16.mxu0 0
      %647 = vmatpush2.bf16.msra.mxu0 0
      %648 = vmatprep.subr.bf16.mxu0 0
      %649 = vmatpush2.bf16.msra.mxu0 0
      %650 = vmatprep.subr.bf16.mxu0 0
      %651 = vmatpush2.bf16.msra.mxu0 0
      %652 = vmatprep.subr.bf16.mxu0 0
      %653 = vmatpush2.bf16.msra.mxu0 0
      %654 = vmatprep.subr.bf16.mxu0 0
      %655 = vmatpush2.bf16.msra.mxu0 0
      %656 = vmatprep.subr.bf16.mxu0 0
      %657 = vmatpush2.bf16.msra.mxu0 0
      %658 = vmatprep.mubr.bf16.mxu0 0
      %659 = vmatmul.mubr.bf16.gmra.mxu0 %v602
      %v660 = vpop.f32.mrf.mxu0
      %v661 = vadd.f32 0.0, %v660
      %v662 = vpop.f32.mrf.mxu0
      %v663 = vadd.f32 0.0, %v662
      %v664 = vpop.f32.mrf.mxu0
      %v665 = vadd.f32 0.0, %v664
      %v666 = vpop.f32.mrf.mxu0
      %v667 = vadd.f32 0.0, %v666
      %668 = vmatprep.mubr.bf16.mxu0 0
      %669 = vmatmul.mubr.bf16.gmra.mxu0 %v605
      %v670 = vpop.f32.mrf.mxu0
      %v671 = vadd.f32 0.0, %v670
      %v672 = vpop.f32.mrf.mxu0
      %v673 = vadd.f32 0.0, %v672
      %v674 = vpop.f32.mrf.mxu0
      %v675 = vadd.f32 0.0, %v674
      %v676 = vpop.f32.mrf.mxu0
      %v677 = vadd.f32 0.0, %v676
      %678 = vmatprep.mubr.bf16.mxu0 0
      %679 = vmatmul.mubr.bf16.gmra.mxu0 %v608
      %v680 = vpop.f32.mrf.mxu0
      %v681 = vadd.f32 0.0, %v680
      %v682 = vpop.f32.mrf.mxu0
      %v683 = vadd.f32 0.0, %v682
      %v684 = vpop.f32.mrf.mxu0
      %v685 = vadd.f32 0.0, %v684
      %v686 = vpop.f32.mrf.mxu0
      %v687 = vadd.f32 0.0, %v686
      %688 = vmatprep.mubr.bf16.mxu0 0
      %689 = vmatmul.mubr.bf16.gmra.mxu0 %v611
      %v690 = vpop.f32.mrf.mxu0
      %v691 = vadd.f32 0.0, %v690
      %v692 = vpop.f32.mrf.mxu0
      %v693 = vadd.f32 0.0, %v692
      %v694 = vpop.f32.mrf.mxu0
      %v695 = vadd.f32 0.0, %v694
      %v696 = vpop.f32.mrf.mxu0
      %v697 = vadd.f32 0.0, %v696
      %698 = vdwg.mxu0
      %699 = vmatprep.subr.bf16.mxu0 0
      %700 = vmatpush1.bf16.msra.mxu0 0
      %701 = vmatprep.subr.bf16.mxu0 0
      %702 = vmatpush1.bf16.msra.mxu0 0
      %703 = vmatprep.subr.bf16.mxu0 0
      %704 = vmatpush1.bf16.msra.mxu0 0
      %705 = vmatprep.subr.bf16.mxu0 0
      %706 = vmatpush1.bf16.msra.mxu0 0
      %707 = vmatprep.subr.bf16.mxu0 0
      %708 = vmatpush1.bf16.msra.mxu0 0
      %709 = vmatprep.subr.bf16.mxu0 0
      %710 = vmatpush1.bf16.msra.mxu0 0
      %711 = vmatprep.subr.bf16.mxu0 0
      %712 = vmatpush1.bf16.msra.mxu0 0
      %713 = vmatprep.subr.bf16.mxu0 0
      %714 = vmatpush1.bf16.msra.mxu0 %v624
      %715 = vmatprep.subr.bf16.mxu0 0
      %716 = vmatpush2.bf16.msra.mxu0 0
      %717 = vmatprep.subr.bf16.mxu0 0
      %718 = vmatpush2.bf16.msra.mxu0 0
      %719 = vmatprep.subr.bf16.mxu0 0
      %720 = vmatpush2.bf16.msra.mxu0 0
      %721 = vmatprep.subr.bf16.mxu0 0
      %722 = vmatpush2.bf16.msra.mxu0 0
      %723 = vmatprep.subr.bf16.mxu0 0
      %724 = vmatpush2.bf16.msra.mxu0 0
      %725 = vmatprep.subr.bf16.mxu0 0
      %726 = vmatpush2.bf16.msra.mxu0 0
      %727 = vmatprep.subr.bf16.mxu0 0
      %728 = vmatpush2.bf16.msra.mxu0 0
      %729 = vmatprep.subr.bf16.mxu0 0
      %730 = vmatpush2.bf16.msra.mxu0 0
      %731 = vmatprep.mubr.bf16.mxu0 0
      %732 = vmatmul.mubr.bf16.gmra.mxu0 %v602
      %v733 = vpop.f32.mrf.mxu0
      %v734 = vadd.f32 0.0, %v733
      %v735 = vpop.f32.mrf.mxu0
      %v736 = vpop.f32.mrf.mxu0
      %v737 = vadd.f32 0.0, %v736
      %v738 = vpop.f32.mrf.mxu0
      %739 = vmatprep.mubr.bf16.mxu0 0
      %740 = vmatmul.mubr.bf16.gmra.mxu0 %v605
      %v741 = vpop.f32.mrf.mxu0
      %v742 = vadd.f32 0.0, %v741
      %v743 = vpop.f32.mrf.mxu0
      %v744 = vpop.f32.mrf.mxu0
      %v745 = vadd.f32 0.0, %v744
      %v746 = vpop.f32.mrf.mxu0
      %747 = vmatprep.mubr.bf16.mxu0 0
      %748 = vmatmul.mubr.bf16.gmra.mxu0 %v608
      %v749 = vpop.f32.mrf.mxu0
      %v750 = vadd.f32 0.0, %v749
      %v751 = vpop.f32.mrf.mxu0
      %v752 = vpop.f32.mrf.mxu0
      %v753 = vadd.f32 0.0, %v752
      %v754 = vpop.f32.mrf.mxu0
      %755 = vmatprep.mubr.bf16.mxu0 0
      %756 = vmatmul.mubr.bf16.gmra.mxu0 %v611
      %v757 = vpop.f32.mrf.mxu0
      %v758 = vadd.f32 0.0, %v757
      %v759 = vpop.f32.mrf.mxu0
      %v760 = vpop.f32.mrf.mxu0
      %v761 = vadd.f32 0.0, %v760
      %v762 = vpop.f32.mrf.mxu0
      %763 = vdwg.mxu0
      %v764 = vpack.c.bf16 %v665, %v661
      %v765 = vpack.c.bf16 %v667, %v663
      %v766 = vpack.c.bf16 %v737, %v734
      %v767 = vpack.c.bf16 %v675, %v671
      %v768 = vpack.c.bf16 %v677, %v673
      %v769 = vpack.c.bf16 %v745, %v742
      %v770 = vpack.c.bf16 %v685, %v681
      %v771 = vpack.c.bf16 %v687, %v683
      %v772 = vpack.c.bf16 %v753, %v750
      %v773 = vpack.c.bf16 %v695, %v691
      %v774 = vpack.c.bf16 %v697, %v693
      %v775 = vpack.c.bf16 %v761, %v758
      %v792 = vunpack.c.l.b16 %v422
      %v793 = vunpack.c.h.b16 %v422
      %v794 = vunpack.c.l.b16 %v423
      %v795 = vunpack.c.l.b16 %v424
      %v796 = vunpack.c.h.b16 %v424
      %v797 = vunpack.c.l.b16 %v425
      %v798 = vunpack.c.l.b16 %v426
      %v799 = vunpack.c.h.b16 %v426
      %v800 = vunpack.c.l.b16 %v427
      %v801 = vunpack.c.l.b16 %v428
      %v802 = vunpack.c.h.b16 %v428
      %v803 = vunpack.c.l.b16 %v429
      %v804 = vunpack.c.l.b16 %v430
      %v805 = vunpack.c.h.b16 %v430
      %v806 = vunpack.c.l.b16 %v431
      %v807 = vunpack.c.l.b16 %v432
      %v808 = vunpack.c.h.b16 %v432
      %v809 = vunpack.c.l.b16 %v433
      %v810 = vunpack.c.l.b16 %v434
      %v811 = vunpack.c.h.b16 %v434
      %v812 = vunpack.c.l.b16 %v435
      %v813 = vunpack.c.l.b16 %v436
      %v814 = vunpack.c.h.b16 %v436
      %v815 = vunpack.c.l.b16 %v437
      %v816 = vpack.c.b16 %v795, %v792
      %v817 = vpack.c.b16 %v796, %v793
      %v818 = vpack.c.b16 %v797, %v794
      %v819 = vpack.c.b16 %v801, %v798
      %v820 = vpack.c.b16 %v802, %v799
      %v821 = vpack.c.b16 %v803, %v800
      %v822 = vpack.c.b16 %v807, %v804
      %v823 = vpack.c.b16 %v808, %v805
      %v824 = vpack.c.b16 %v809, %v806
      %v825 = vpack.c.b16 %v813, %v810
      %v826 = vpack.c.b16 %v814, %v811
      %v827 = vpack.c.b16 %v815, %v812
      %v840 = vmul.bf16 %v764, %v816
      %v841 = vmul.bf16 %v765, %v817
      %v842 = vmul.bf16 %v766, %v818
      %v843 = vmul.bf16 %v767, %v819
      %v844 = vmul.bf16 %v768, %v820
      %v845 = vmul.bf16 %v769, %v821
      %v846 = vmul.bf16 %v770, %v822
      %v847 = vmul.bf16 %v771, %v823
      %v848 = vmul.bf16 %v772, %v824
      %v849 = vmul.bf16 %v773, %v825
      %v850 = vmul.bf16 %v774, %v826
      %v851 = vmul.bf16 %v775, %v827
      %v852 = vld [vmem:[%s6] sm:$0xf]
      %v853 = vld [vmem:[%s6 + $0x4] sm:$0xf]
      %v854 = vld [vmem:[%s6 + $0x8] sm:$0xf]
      %v855 = vld [vmem:[%s6 + $0xc] sm:$0xf]
      %v856 = vld [vmem:[%s6 + $0x10] sm:$0xf]
      %v857 = vld [vmem:[%s6 + $0x14] sm:$0xf]
      %v858 = vld [vmem:[%s6 + $0x18] sm:$0xf]
      %v859 = vld [vmem:[%s6 + $0x1c] sm:$0xf]
      %v860 = vld [vmem:[%s6 + $0x20] sm:$0xf]
      %v861 = vld [vmem:[%s6 + $0x24] sm:$0xf]
      %v862 = vld [vmem:[%s6 + $0x28] sm:$0xf]
      %v863 = vld [vmem:[%s6 + $0x2c] sm:$0xf]
      %v864 = vld [vmem:[%s6 + $0x30] sm:$0xf]
      %v865 = vld [vmem:[%s6 + $0x34] sm:$0xf]
      %v866 = vld [vmem:[%s6 + $0x38] sm:$0xf]
      %v867 = vld [vmem:[%s6 + $0x3c] sm:$0xf]
      %v868 = vld [vmem:[%s6 + $0x40] sm:$0xf]
      %v869 = vld [vmem:[%s6 + $0x44] sm:$0xf]
      %v870 = vld [vmem:[%s6 + $0x48] sm:$0xf]
      %v871 = vld [vmem:[%s6 + $0x4c] sm:$0xf]
      %v872 = vld [vmem:[%s6 + $0x50] sm:$0xf]
      %v873 = vld [vmem:[%s6 + $0x54] sm:$0xf]
      %v874 = vld [vmem:[%s6 + $0x58] sm:$0xf]
      %v875 = vld [vmem:[%s6 + $0x5c] sm:$0xf]
      %v876 = vld [vmem:[%s6 + $0x60] sm:$0xf]
      %v877 = vld [vmem:[%s6 + $0x64] sm:$0xf]
      %v878 = vld [vmem:[%s6 + $0x68] sm:$0xf]
      %v879 = vld [vmem:[%s6 + $0x6c] sm:$0xf]
      %v880 = vld [vmem:[%s6 + $0x70] sm:$0xf]
      %v881 = vld [vmem:[%s6 + $0x74] sm:$0xf]
      %v882 = vld [vmem:[%s6 + $0x78] sm:$0xf]
      %v883 = vld [vmem:[%s6 + $0x7c] sm:$0xf]
      %v884 = vld [vmem:[%s6 + $0x80] sm:$0xf]
      %v885 = vld [vmem:[%s6 + $0x84] sm:$0xf]
      %v886 = vld [vmem:[%s6 + $0x88] sm:$0xf]
      %v887 = vld [vmem:[%s6 + $0x8c] sm:$0xf]
      %v924 = vunpack.c.l.b16 %v852
      %v925 = vunpack.c.l.b16 %v853
      %v926 = vunpack.c.l.b16 %v854
      %v927 = vunpack.c.l.b16 %v855
      %v928 = vunpack.c.l.b16 %v856
      %v929 = vunpack.c.l.b16 %v857
      %v930 = vunpack.c.l.b16 %v858
      %v931 = vunpack.c.l.b16 %v859
      %v932 = vunpack.c.l.b16 %v860
      %v933 = vunpack.c.l.b16 %v861
      %v934 = vunpack.c.l.b16 %v862
      %v935 = vunpack.c.l.b16 %v863
      %v936 = vunpack.c.l.b16 %v864
      %v937 = vunpack.c.l.b16 %v865
      %v938 = vunpack.c.l.b16 %v866
      %v939 = vunpack.c.l.b16 %v867
      %v940 = vunpack.c.l.b16 %v868
      %v941 = vunpack.c.l.b16 %v869
      %v942 = vunpack.c.l.b16 %v870
      %v943 = vunpack.c.l.b16 %v871
      %v944 = vunpack.c.l.b16 %v872
      %v945 = vunpack.c.l.b16 %v873
      %v946 = vunpack.c.l.b16 %v874
      %v947 = vunpack.c.l.b16 %v875
      %v948 = vunpack.c.l.b16 %v876
      %v949 = vunpack.c.l.b16 %v877
      %v950 = vunpack.c.l.b16 %v878
      %v951 = vunpack.c.l.b16 %v879
      %v952 = vunpack.c.l.b16 %v880
      %v953 = vunpack.c.l.b16 %v881
      %v954 = vunpack.c.l.b16 %v882
      %v955 = vunpack.c.l.b16 %v883
      %v956 = vunpack.c.l.b16 %v884
      %v957 = vunpack.c.l.b16 %v885
      %v958 = vunpack.c.l.b16 %v886
      %v959 = vunpack.c.l.b16 %v887
      %v960 = vpack.c.b16 %v925, %v924
      %v961 = vpack.c.b16 %v927, %v926
      %v962 = vpack.c.b16 %v929, %v928
      %v963 = vpack.c.b16 %v931, %v930
      %v964 = vpack.c.b16 %v933, %v932
      %v965 = vpack.c.b16 %v935, %v934
      %v966 = vpack.c.b16 %v937, %v936
      %v967 = vpack.c.b16 %v939, %v938
      %v968 = vpack.c.b16 %v941, %v940
      %v969 = vpack.c.b16 %v943, %v942
      %v970 = vpack.c.b16 %v945, %v944
      %v971 = vpack.c.b16 %v947, %v946
      %v972 = vpack.c.b16 %v949, %v948
      %v973 = vpack.c.b16 %v951, %v950
      %v974 = vpack.c.b16 %v953, %v952
      %v975 = vpack.c.b16 %v955, %v954
      %v976 = vpack.c.b16 %v957, %v956
      %v977 = vpack.c.b16 %v959, %v958
      %v997 = vsel %vm485, %v842, 0
      %v1000 = vsel %vm485, %v845, 0
      %v1003 = vsel %vm485, %v848, 0
      %v1006 = vsel %vm485, %v851, 0
      %1008 = vmatprep.subr.bf16.mxu0 0
      %1009 = vmatpush1.bf16.msra.mxu0 %v967
      %1010 = vmatprep.subr.bf16.mxu0 0
      %1011 = vmatpush1.bf16.msra.mxu0 %v966
      %1012 = vmatprep.subr.bf16.mxu0 0
      %1013 = vmatpush1.bf16.msra.mxu0 %v965
      %1014 = vmatprep.subr.bf16.mxu0 0
      %1015 = vmatpush1.bf16.msra.mxu0 %v964
      %1016 = vmatprep.subr.bf16.mxu0 0
      %1017 = vmatpush1.bf16.msra.mxu0 %v963
      %1018 = vmatprep.subr.bf16.mxu0 0
      %1019 = vmatpush1.bf16.msra.mxu0 %v962
      %1020 = vmatprep.subr.bf16.mxu0 0
      %1021 = vmatpush1.bf16.msra.mxu0 %v961
      %1022 = vmatprep.subr.bf16.mxu0 0
      %1023 = vmatpush1.bf16.msra.mxu0 %v960
      %1024 = vmatprep.subr.bf16.mxu0 0
      %1025 = vmatpush2.bf16.msra.mxu0 %v975
      %1026 = vmatprep.subr.bf16.mxu0 0
      %1027 = vmatpush2.bf16.msra.mxu0 %v974
      %1028 = vmatprep.subr.bf16.mxu0 0
      %1029 = vmatpush2.bf16.msra.mxu0 %v973
      %1030 = vmatprep.subr.bf16.mxu0 0
      %1031 = vmatpush2.bf16.msra.mxu0 %v972
      %1032 = vmatprep.subr.bf16.mxu0 0
      %1033 = vmatpush2.bf16.msra.mxu0 %v971
      %1034 = vmatprep.subr.bf16.mxu0 0
      %1035 = vmatpush2.bf16.msra.mxu0 %v970
      %1036 = vmatprep.subr.bf16.mxu0 0
      %1037 = vmatpush2.bf16.msra.mxu0 %v969
      %1038 = vmatprep.subr.bf16.mxu0 0
      %1039 = vmatpush2.bf16.msra.mxu0 %v968
      %1040 = vmatprep.mubr.bf16.mxu0 %v841
      %1041 = vmatmul.mubr.bf16.gmra.mxu0 %v840
      %v1042 = vpop.f32.mrf.mxu0
      %v1043 = vadd.f32 0.0, %v1042
      %v1044 = vpop.f32.mrf.mxu0
      %v1045 = vpop.f32.mrf.mxu0
      %v1046 = vadd.f32 0.0, %v1045
      %v1047 = vpop.f32.mrf.mxu0
      %1048 = vmatprep.mubr.bf16.mxu0 %v844
      %1049 = vmatmul.mubr.bf16.gmra.mxu0 %v843
      %v1050 = vpop.f32.mrf.mxu0
      %v1051 = vadd.f32 0.0, %v1050
      %v1052 = vpop.f32.mrf.mxu0
      %v1053 = vpop.f32.mrf.mxu0
      %v1054 = vadd.f32 0.0, %v1053
      %v1055 = vpop.f32.mrf.mxu0
      %1056 = vmatprep.mubr.bf16.mxu0 %v847
      %1057 = vmatmul.mubr.bf16.gmra.mxu0 %v846
      %v1058 = vpop.f32.mrf.mxu0
      %v1059 = vadd.f32 0.0, %v1058
      %v1060 = vpop.f32.mrf.mxu0
      %v1061 = vpop.f32.mrf.mxu0
      %v1062 = vadd.f32 0.0, %v1061
      %v1063 = vpop.f32.mrf.mxu0
      %1064 = vmatprep.mubr.bf16.mxu0 %v850
      %1065 = vmatmul.mubr.bf16.gmra.mxu0 %v849
      %v1066 = vpop.f32.mrf.mxu0
      %v1067 = vadd.f32 0.0, %v1066
      %v1068 = vpop.f32.mrf.mxu0
      %v1069 = vpop.f32.mrf.mxu0
      %v1070 = vadd.f32 0.0, %v1069
      %v1071 = vpop.f32.mrf.mxu0
      %1072 = vdwg.mxu0
      %1073 = vmatprep.subr.bf16.mxu0 0
      %1074 = vmatpush1.bf16.msra.mxu0 0
      %1075 = vmatprep.subr.bf16.mxu0 0
      %1076 = vmatpush1.bf16.msra.mxu0 0
      %1077 = vmatprep.subr.bf16.mxu0 0
      %1078 = vmatpush1.bf16.msra.mxu0 0
      %1079 = vmatprep.subr.bf16.mxu0 0
      %1080 = vmatpush1.bf16.msra.mxu0 0
      %1081 = vmatprep.subr.bf16.mxu0 0
      %1082 = vmatpush1.bf16.msra.mxu0 0
      %1083 = vmatprep.subr.bf16.mxu0 0
      %1084 = vmatpush1.bf16.msra.mxu0 0
      %1085 = vmatprep.subr.bf16.mxu0 0
      %1086 = vmatpush1.bf16.msra.mxu0 %v977
      %1087 = vmatprep.subr.bf16.mxu0 0
      %1088 = vmatpush1.bf16.msra.mxu0 %v976
      %1089 = vmatprep.subr.bf16.mxu0 0
      %1090 = vmatpush2.bf16.msra.mxu0 0
      %1091 = vmatprep.subr.bf16.mxu0 0
      %1092 = vmatpush2.bf16.msra.mxu0 0
      %1093 = vmatprep.subr.bf16.mxu0 0
      %1094 = vmatpush2.bf16.msra.mxu0 0
      %1095 = vmatprep.subr.bf16.mxu0 0
      %1096 = vmatpush2.bf16.msra.mxu0 0
      %1097 = vmatprep.subr.bf16.mxu0 0
      %1098 = vmatpush2.bf16.msra.mxu0 0
      %1099 = vmatprep.subr.bf16.mxu0 0
      %1100 = vmatpush2.bf16.msra.mxu0 0
      %1101 = vmatprep.subr.bf16.mxu0 0
      %1102 = vmatpush2.bf16.msra.mxu0 0
      %1103 = vmatprep.subr.bf16.mxu0 0
      %1104 = vmatpush2.bf16.msra.mxu0 0
      %1105 = vmatprep.mubr.bf16.mxu0 0
      %1106 = vmatmul.mubr.bf16.gmra.mxu0 %v997
      %v1107 = vpop.f32.mrf.mxu0
      %v1108 = vadd.f32 %v1043, %v1107
      %v1109 = vpop.f32.mrf.mxu0
      %v1110 = vpop.f32.mrf.mxu0
      %v1111 = vadd.f32 %v1046, %v1110
      %v1112 = vpop.f32.mrf.mxu0
      %1113 = vmatprep.mubr.bf16.mxu0 0
      %1114 = vmatmul.mubr.bf16.gmra.mxu0 %v1000
      %v1115 = vpop.f32.mrf.mxu0
      %v1116 = vadd.f32 %v1051, %v1115
      %v1117 = vpop.f32.mrf.mxu0
      %v1118 = vpop.f32.mrf.mxu0
      %v1119 = vadd.f32 %v1054, %v1118
      %v1120 = vpop.f32.mrf.mxu0
      %1121 = vmatprep.mubr.bf16.mxu0 0
      %1122 = vmatmul.mubr.bf16.gmra.mxu0 %v1003
      %v1123 = vpop.f32.mrf.mxu0
      %v1124 = vadd.f32 %v1059, %v1123
      %v1125 = vpop.f32.mrf.mxu0
      %v1126 = vpop.f32.mrf.mxu0
      %v1127 = vadd.f32 %v1062, %v1126
      %v1128 = vpop.f32.mrf.mxu0
      %1129 = vmatprep.mubr.bf16.mxu0 0
      %1130 = vmatmul.mubr.bf16.gmra.mxu0 %v1006
      %v1131 = vpop.f32.mrf.mxu0
      %v1132 = vadd.f32 %v1067, %v1131
      %v1133 = vpop.f32.mrf.mxu0
      %v1134 = vpop.f32.mrf.mxu0
      %v1135 = vadd.f32 %v1070, %v1134
      %v1136 = vpop.f32.mrf.mxu0
      %1137 = vdwg.mxu0
      %1138 = vst.msk [vmem:[%s391] sm:$0xff] %vm485, %v1108
      %1139 = vst.msk [vmem:[%s391 + $0x8] sm:$0xff] %vm485, %v1111
      %1140 = vst.msk [vmem:[%s391 + $0x10] sm:$0xff] %vm485, %v1116
      %1141 = vst.msk [vmem:[%s391 + $0x18] sm:$0xff] %vm485, %v1119
      %1142 = vst.msk [vmem:[%s391 + $0x20] sm:$0xff] %vm485, %v1124
      %1143 = vst.msk [vmem:[%s391 + $0x28] sm:$0xff] %vm485, %v1127
      %1144 = vst.msk [vmem:[%s391 + $0x30] sm:$0xff] %vm485, %v1132
      %1145 = vst.msk [vmem:[%s391 + $0x38] sm:$0xff] %vm485, %v1135
      %s1146 = smul.u32 8, %s23
      %p1147 = scmp.lt.s32.totalorder %s22, 3
      %s1148 = scalar_select %p1147, %s22, 3
      %p1149 = scmp.lt.s32.totalorder %s1146, 7
      %s1150 = scalar_select %p1149, %s1146, 7
      %s1151 = smul.addr %s1148, 8
      %s1152 = sadd.s32 %s1150, %s1151
      %s1153 = smul.addr %s1152, 8
      %s1154 = scalar_lea.vmem %s7, %s1153
      // Predicated region
      $region49: #{tpu_custom_call.1} parent=47 // pred_check
        %p1155 = pneg %p218
      $region50: #{tpu_custom_call.1} parent=47 // pred_check_branch
        %1157 = sbr.rel (%p1155) target = $region52
      $region51: #{tpu_custom_call.1} parent=47 // pred_region
        %s1158 = smul.u32 8, %s23
      $region52: #{tpu_custom_call.1} parent=47 // pred_fallthru
        _
    $region48: #{tpu_custom_call.1} parent=5 // pred_fallthru
      _
    %p1159 = scmp.le.s32.totalorder 2, %s13
    // Predicated region
    $region53: #{tpu_custom_call.1} parent=5 // pred_check
      %p1160 = pneg %p1159
    $region54: #{tpu_custom_call.1} parent=5 // pred_check_branch
      %1162 = sbr.rel (%p1160) target = $region56
    $region55: #{tpu_custom_call.1} parent=5 // pred_region
      %s1163 = ssub.s32 %s13, 2
      // Predicated region
      $region57: #{tpu_custom_call.1} parent=55 // pred_check
        %p1164 = pneg %p224
      $region58: #{tpu_custom_call.1} parent=55 // pred_check_branch
        %1166 = sbr.rel (%p1164) target = $region60
      $region59: #{tpu_custom_call.1} parent=55 // pred_region
        %s1167 = smul.u32 8, %s25
        %p1168 = scmp.lt.s32.totalorder %s24, 3
        %s1169 = scalar_select %p1168, %s24, 3
        %p1170 = scmp.lt.s32.totalorder %s1167, 7
        %s1171 = scalar_select %p1170, %s1167, 7
        %s1172 = smul.addr %s1169, 8
        %s1173 = sadd.s32 %s1171, %s1172
        %s1174 = smul.addr %s1173, 8
        %s1175 = scalar_lea.vmem %s7, %s1174
      $region60: #{tpu_custom_call.1} parent=55 // pred_fallthru
        _
    $region56: #{tpu_custom_call.1} parent=5 // pred_fallthru
      _
  $region6: #{tpu_custom_call.1} parent=0 // loop_footer
    %s17 = sadd.s32 1, %s13
  $region7: #{tpu_custom_call.1} parent=0 // loop_footer_branch
    %12 = sbr.rel target = $region3
  $region8: #{tpu_custom_call.1} parent=0 // loop_exit
    _

</llo_original>
